<compile_context>
chip_gen: v6e
topology: v6e:2x2x1
jax: 0.10.0
libtpu: 0.0.40
codegen_flags: <defaults>
</compile_context>

<pallas_src>
import functools

import jax
import jax.numpy as jnp
from jax.experimental import pallas as pl
from jax.experimental.pallas import tpu as pltpu

LANES = 128
DEFAULT_TILE_ROWS = 8192      # 4 MiB f32 block -> ~86% of HBM roofline
SMALL_N_FALLBACK = 65536      # below this, plain XLA beats the pallas launch
NUM_SPLITS_TARGET = 2         # leading "parallel" axis (v7x dual-TC)


def _plan(rows_full, max_tile_rows, sub_align):
    """Pick (tile_rows, num_splits, steps_per_split); None -> no pallas."""
    tile_cap = min(max_tile_rows, rows_full)
    tile_cap -= tile_cap % sub_align
    if tile_cap <= 0:
        return None
    steps = -(-rows_full // tile_cap)          # cdiv
    if steps >= 2 and steps % 2:
        steps += 1                             # keep it splittable across 2 TCs
    tile_rows = rows_full // steps
    tile_rows -= tile_rows % sub_align
    if tile_rows <= 0:
        tile_rows = tile_cap
        steps = 1
    num_splits = NUM_SPLITS_TARGET if steps % NUM_SPLITS_TARGET == 0 else 1
    return tile_rows, num_splits, steps // num_splits


def _adv_loss_kernel(real_ref, fake_ref, out_ref, acc_ref, *, adv_type):
    i = pl.program_id(1)

    @pl.when(i == 0)
    def _init():
        acc_ref[...] = jnp.zeros_like(acc_ref)

    real = real_ref[...].astype(jnp.float32)
    fake = fake_ref[...].astype(jnp.float32)

    if adv_type == "wgan-gp":
        # -mean(real) + mean(fake)  ->  sum(fake - real) / n
        elem = fake - real
    else:  # hinge
        elem = jnp.maximum(1.0 - real, 0.0) + jnp.maximum(1.0 + fake, 0.0)

    # Fold the tile into (8,128) vreg-aligned groups: pure VPU vector adds,
    # no per-step cross-lane (XLU) reduction, no lane-sparse (1,1) RMW.
    tile_rows = elem.shape[0]
    acc_ref[...] += elem.reshape(tile_rows // 8, 8, LANES).sum(axis=0)

    @pl.when(i == pl.num_programs(1) - 1)
    def _finalize():
        # Single cross-lane reduce per split; scaling by 1/n done in wrapper.
        out_ref[...] = jnp.sum(acc_ref[...], keepdims=True)


def _partial_sum_xla(adv_type, real, fake):
    real = real.astype(jnp.float32)
    fake = fake.astype(jnp.float32)
    if adv_type == "wgan-gp":
        return jnp.sum(fake - real)
    return jnp.sum(jnp.maximum(1.0 - real, 0.0) + jnp.maximum(1.0 + fake, 0.0))


def _reference_loss(adv_type, d_out_real, d_out_fake):
    real = d_out_real.astype(jnp.float32)
    fake = d_out_fake.astype(jnp.float32)
    if adv_type == "wgan-gp":
        return -jnp.mean(real) + jnp.mean(fake)
    return (jnp.mean(jnp.maximum(1.0 - real, 0.0))
            + jnp.mean(jnp.maximum(1.0 + fake, 0.0)))


def _adv_loss_pallas(adv_type, d_out_real, d_out_fake, max_tile_rows):
    n = d_out_real.size
    itemsize = jnp.dtype(d_out_real.dtype).itemsize
    # Sublane alignment: 8 rows for 32-bit dtypes, 16 for 16-bit, ...
    sub_align = 8 * max(1, 4 // itemsize)

    rows_full = n // LANES
    lane_rem = n % LANES

    plan = _plan(rows_full, max_tile_rows, sub_align)
    if plan is None:
        return _reference_loss(adv_type, d_out_real, d_out_fake)
    tile_rows, num_splits, steps_per_split = plan
    steps = num_splits * steps_per_split
    rows_pallas = steps * tile_rows
    n_pallas = rows_pallas * LANES

    real_flat = d_out_real.reshape(-1)
    fake_flat = d_out_fake.reshape(-1)

    if lane_rem == 0:
        # Pure bitcast view; Pallas only ever indexes the first rows_pallas
        # rows, so no pad / no prefix copy / no extra HBM pass.
        real2d = real_flat.reshape(rows_full, LANES)
        fake2d = fake_flat.reshape(rows_full, LANES)
    else:
        # Rare for conv discriminator maps: n not a multiple of 128.  The
        # prefix slice may materialize a copy; the ragged lane tail goes to
        # the XLA partial sum below either way.
        k = rows_full * LANES
        real2d = real_flat[:k].reshape(rows_full, LANES)
        fake2d = fake_flat[:k].reshape(rows_full, LANES)

    block_bytes = tile_rows * LANES * itemsize
    vmem_limit = min(48 << 20, max(40 << 20, 6 * block_bytes))

    kernel = functools.partial(_adv_loss_kernel, adv_type=adv_type)

    in_map = lambda c, i, spp=steps_per_split: (c * spp + i, 0)

    partials = pl.pallas_call(
        kernel,
        out_shape=jax.ShapeDtypeStruct((num_splits, 1), jnp.float32),
        grid_spec=pltpu.PrefetchScalarGridSpec(
            num_scalar_prefetch=0,
            grid=(num_splits, steps_per_split),
            in_specs=[
                pl.BlockSpec((tile_rows, LANES), in_map),
                pl.BlockSpec((tile_rows, LANES), in_map),
            ],
            out_specs=pl.BlockSpec((1, 1), lambda c, i: (c, 0)),
            scratch_shapes=[pltpu.VMEM((8, LANES), jnp.float32)],
        ),
        compiler_params=pltpu.CompilerParams(
            dimension_semantics=("parallel", "arbitrary"),
            vmem_limit_bytes=vmem_limit,
        ),
        cost_estimate=pl.CostEstimate(
            flops=4 * n_pallas,
            transcendentals=0,
            bytes_accessed=2 * n_pallas * itemsize + num_splits * 4,
        ),
    )(real2d, fake2d)

    total = jnp.sum(partials)
    if n_pallas < n:
        # Ragged tail (< one tile): tiny XLA reduction on a small slice.
        total = total + _partial_sum_xla(
            adv_type, real_flat[n_pallas:], fake_flat[n_pallas:])
    return total / n


class CriterionAdv:
    """JAX/Pallas port of the PyTorch CriterionAdv module."""

    def __init__(self, adv_type, *, min_pallas_elements=SMALL_N_FALLBACK,
                 max_tile_rows=DEFAULT_TILE_ROWS):
        if adv_type != "wgan-gp" and adv_type != "hinge":
            raise ValueError("adv_type should be wgan-gp or hinge")
        self.adv_loss = adv_type
        self.min_pallas_elements = min_pallas_elements
        self.max_tile_rows = max_tile_rows

    def __call__(self, d_out_S, d_out_T):
        assert d_out_S[0].shape == d_out_T[0].shape, (
            "the output dim of D with teacher and student as input differ"
        )
        d_out_real = d_out_T[0]  # teacher
        d_out_fake = d_out_S[0]  # student

        n = d_out_real.size
        if n < max(self.min_pallas_elements, 1):
            # Small-n fallback: fused XLA reduction beats pallas launch +
            # per-shape recompile overhead at these sizes.
            return _reference_loss(self.adv_loss, d_out_real, d_out_fake)

        return _adv_loss_pallas(self.adv_loss, d_out_real, d_out_fake,
                                self.max_tile_rows)


if __name__ == "__main__":
    key = jax.random.PRNGKey(0)
    ok = True

    # (shape, dtype, min_pallas_elements, max_tile_rows, atol/rtol)
    test_cases = [
        ((2, 4, 32, 32), jnp.float32, 0, DEFAULT_TILE_ROWS, 1e-5),  # single tile
        ((2, 4, 32, 32), jnp.float32, 0, 8, 1e-5),         # grid (2,4), split+acc
        ((2, 3, 17, 19), jnp.float32, 0, DEFAULT_TILE_ROWS, 1e-5),  # ragged tail
        ((2, 4, 32, 32), jnp.bfloat16, 0, 16, 1e-4),       # bf16, sub_align=16
        ((2, 1, 16, 16), jnp.float32, SMALL_N_FALLBACK, DEFAULT_TILE_ROWS, 1e-5),
        ((8, 8, 64, 64), jnp.float32, SMALL_N_FALLBACK, DEFAULT_TILE_ROWS, 1e-5),
    ]

    for idx, (shape, dtype, min_elems, max_rows, tol) in enumerate(test_cases):
        k1, k2 = jax.random.split(jax.random.fold_in(key, idx))
        d_out_S = (jax.random.normal(k1, shape, dtype=dtype),)
        d_out_T = (jax.random.normal(k2, shape, dtype=dtype),)
        for adv_type in ("hinge", "wgan-gp"):
            crit = CriterionAdv(adv_type, min_pallas_elements=min_elems,
                                max_tile_rows=max_rows)
            loss = jax.block_until_ready(crit(d_out_S, d_out_T))
            ref = _reference_loss(adv_type, d_out_T[0], d_out_S[0])
            if not jnp.allclose(loss, ref, rtol=tol, atol=tol):
                ok = False
                print(f"MISMATCH shape={shape} dtype={dtype} type={adv_type}: "
                      f"kernel={loss} ref={ref}")

    if ok:
        print("KERNEL_OK")
</pallas_src>

<mosaic_0001>
module attributes {stable_mosaic.version = 11 : i64} {
  func.func @_adv_loss_kernel(%arg0: i32, %arg1: i32, %arg2: memref<64x128xf32, #tpu.memory_space<vmem>>, %arg3: memref<64x128xf32, #tpu.memory_space<vmem>>, %arg4: memref<1x1xf32, #tpu.memory_space<vmem>>, %arg5: memref<8x128xf32, #tpu.memory_space<vmem>>) attributes {dimension_semantics = [#tpu.dimension_semantics<parallel>, #tpu.dimension_semantics<arbitrary>], iteration_bounds = array<i64: 1, 1>, scalar_prefetch = 0 : i64, scratch_operands = 1 : i64, tpu.core_type = #tpu.core_type<tc>, window_params = [{transform_indices = @transform_0, window_bounds = array<i64: 64, 128>}, {transform_indices = @transform_1, window_bounds = array<i64: 64, 128>}, {transform_indices = @transform_2, window_bounds = array<i64: 1, 1>}]} {
    %c0_i32 = arith.constant 0 : i32
    %0 = arith.cmpi eq, %arg1, %c0_i32 : i32
    %1 = arith.extui %0 : i1 to i32
    %c0_i32_0 = arith.constant 0 : i32
    %2 = arith.cmpi ne, %1, %c0_i32_0 : i32
    scf.if %2 {
      %cst_14 = arith.constant 0.000000e+00 : f32
      %22 = vector.broadcast %cst_14 : f32 to vector<8x128xf32>
      %c0_15 = arith.constant 0 : index
      %c0_16 = arith.constant 0 : index
      %23 = vector.load %arg5[%c0_15, %c0_16] : memref<8x128xf32, #tpu.memory_space<vmem>>, vector<8x128xf32>
      tpu.vector_store %arg5[%c0_15, %c0_16], %22 {strides = array<i32>} : memref<8x128xf32, #tpu.memory_space<vmem>>, vector<8x128xf32>,
    } else {
    }
    %c0 = arith.constant 0 : index
    %c0_1 = arith.constant 0 : index
    %3 = vector.load %arg2[%c0, %c0_1] : memref<64x128xf32, #tpu.memory_space<vmem>>, vector<64x128xf32>
    %c0_2 = arith.constant 0 : index
    %c0_3 = arith.constant 0 : index
    %4 = vector.load %arg3[%c0_2, %c0_3] : memref<64x128xf32, #tpu.memory_space<vmem>>, vector<64x128xf32>
    %cst = arith.constant 1.000000e+00 : f32
    %5 = vector.broadcast %cst : f32 to vector<64x128xf32>
    %6 = arith.subf %5, %3 : vector<64x128xf32>
    %cst_4 = arith.constant 0.000000e+00 : f32
    %7 = vector.broadcast %cst_4 : f32 to vector<64x128xf32>
    %8 = arith.maximumf %6, %7 : vector<64x128xf32>
    %cst_5 = arith.constant 1.000000e+00 : f32
    %9 = vector.broadcast %cst_5 : f32 to vector<64x128xf32>
    %10 = arith.addf %9, %4 : vector<64x128xf32>
    %cst_6 = arith.constant 0.000000e+00 : f32
    %11 = vector.broadcast %cst_6 : f32 to vector<64x128xf32>
    %12 = arith.maximumf %10, %11 : vector<64x128xf32>
    %13 = arith.addf %8, %12 : vector<64x128xf32>
    %c0_7 = arith.constant 0 : index
    %c0_8 = arith.constant 0 : index
    %14 = vector.load %arg5[%c0_7, %c0_8] : memref<8x128xf32, #tpu.memory_space<vmem>>, vector<8x128xf32>
    %15 = vector.shape_cast %13 : vector<64x128xf32> to vector<8x8x128xf32>
    %cst_9 = arith.constant dense<0.000000e+00> : vector<8x128xf32>
    %16 = vector.multi_reduction <add>, %15, %cst_9 [0] : vector<8x8x128xf32> to vector<8x128xf32>
    %17 = arith.addf %14, %16 : vector<8x128xf32>
    %c0_10 = arith.constant 0 : index
    %c0_11 = arith.constant 0 : index
    %18 = vector.load %arg5[%c0_10, %c0_11] : memref<8x128xf32, #tpu.memory_space<vmem>>, vector<8x128xf32>
    tpu.vector_store %arg5[%c0_10, %c0_11], %17 {strides = array<i32>} : memref<8x128xf32, #tpu.memory_space<vmem>>, vector<8x128xf32>,
    %c0_i32_12 = arith.constant 0 : i32
    %19 = arith.cmpi eq, %arg1, %c0_i32_12 : i32
    %20 = arith.extui %19 : i1 to i32
    %c0_i32_13 = arith.constant 0 : i32
    %21 = arith.cmpi ne, %20, %c0_i32_13 : i32
    scf.if %21 {
      %c0_14 = arith.constant 0 : index
      %c0_15 = arith.constant 0 : index
      %22 = vector.load %arg5[%c0_14, %c0_15] : memref<8x128xf32, #tpu.memory_space<vmem>>, vector<8x128xf32>
      %23 = vector.shape_cast %22 : vector<8x128xf32> to vector<1x8x128xf32>
      %cst_16 = arith.constant dense<0.000000e+00> : vector<1xf32>
      %24 = vector.multi_reduction <add>, %23, %cst_16 [1, 2] : vector<1x8x128xf32> to vector<1xf32>
      %25 = vector.shape_cast %24 : vector<1xf32> to vector<1x1x1xf32>
      %26 = vector.extract %25[0, 0, 0] : f32 from vector<1x1x1xf32>
      %27 = vector.broadcast %26 : f32 to vector<1x1xf32>
      %c0_17 = arith.constant 0 : index
      %c0_18 = arith.constant 0 : index
      %28 = vector.load %arg4[%c0_17, %c0_18] : memref<1x1xf32, #tpu.memory_space<vmem>>, vector<1x1xf32>
      tpu.vector_store %arg4[%c0_17, %c0_18], %27 {strides = array<i32>} : memref<1x1xf32, #tpu.memory_space<vmem>>, vector<1x1xf32>,
    } else {
    }
    return
  }
  func.func @transform_0(%arg0: i32, %arg1: i32) -> (i32, i32) {
    %c1_i32 = arith.constant 1 : i32
    %0 = arith.muli %arg0, %c1_i32 : i32
    %1 = arith.addi %0, %arg1 : i32
    %c0_i32 = arith.constant 0 : i32
    %c0_i32_0 = arith.constant 0 : i32
    return %1, %c0_i32 : i32, i32
  }
  func.func @transform_1(%arg0: i32, %arg1: i32) -> (i32, i32) {
    %c1_i32 = arith.constant 1 : i32
    %0 = arith.muli %arg0, %c1_i32 : i32
    %1 = arith.addi %0, %arg1 : i32
    %c0_i32 = arith.constant 0 : i32
    %c0_i32_0 = arith.constant 0 : i32
    return %1, %c0_i32 : i32, i32
  }
  func.func @transform_2(%arg0: i32, %arg1: i32) -> (i32, i32) {
    %c0_i32 = arith.constant 0 : i32
    %c0_i32_0 = arith.constant 0 : i32
    return %arg0, %c0_i32 : i32, i32
  }
}

</mosaic_0001>

<llo_original>
// kernel: tpu_custom_call.1
$region0: #{tpu_custom_call.1}
  #allocation0 [shape = 'u32[]', space=smem, size = 0x4, offset = 0x4, fixed_abs, tag = 'smem constant byte address 0x4 - core index']
  #allocation1 [shape = 'u32[144,128]{1,0:T(1,128)}', space=vmem, size = 0x12000, scoped, tag = 'internal scratch']
  #allocation2 [shape = 'f32[8,128]{1,0:T(8,128)}', space=vmem, size = 0x1000, scoped, tag = 'scratch operand']
  %s0 = inlined_call_operand.hbm [shape: f32[64,128], index: 0, kind: input, shape index: {}]
  %s1 = inlined_call_operand.hbm [shape: f32[64,128], index: 1, kind: input, shape index: {}]
  %s2 = inlined_call_operand.hbm [shape: f32[1,1], index: 2, kind: output, shape index: {}]
  %s3 = sld [smem:[#allocation0]]
  $region34: #{tpu_custom_call.1} parent=0
    _
  %s5 = ssub.s32 1, %s3
  %s6 = scalar_select 0, %s5, %s3
  $region1: #{tpu_custom_call.1} parent=0
    #allocation3 [shape = 'u8[32768]{0}', space=vmem, size = 0x8000, scoped, tag = 'input window, operand 0, single buffered']
    #allocation4 [shape = 's32[1]{0}', space=sflag, size = 0x4, scoped, tag = 'scoped memory for tpu_custom_call.1']
    #allocation5 [shape = 's32[1]{0}', space=sflag, size = 0x4, scoped, tag = 'scoped memory for tpu_custom_call.1']
    #allocation6 [shape = 'u8[32768]{0}', space=vmem, size = 0x8000, scoped, tag = 'input window, operand 1, single buffered']
    #allocation7 [shape = 's32[1]{0}', space=sflag, size = 0x4, scoped, tag = 'scoped memory for tpu_custom_call.1']
    #allocation8 [shape = 'u8[512]{0}', space=vmem, size = 0x400, scoped, tag = 'output window, operand 0, single buffered']
    %7 = vsyncpa [#allocation4], 0
    %8 = vsyncpa [#allocation7], 0
    %9 = vsyncpa [#allocation5], 0
    // Predicated region
    $region2: #{tpu_custom_call.1} parent=1 // pred_check
      _
    $region3: #{tpu_custom_call.1} parent=1 // pred_check_branch
      %11 = sbr.rel (0) target = $region5
    $region4: #{tpu_custom_call.1} parent=1 // pred_region
      %s12 = sadd.s32 0, 0
      %s13 = smul.u32 8, %s12
      %s15 = ssub.s32 1024, 1024
      %16 = vsyncadd [#allocation4], %s15
      %s17 = smul.addr %s13, 128
      %s18 = scalar_lea.hbm %s0, %s17
      %s19 = sshll.u32 [#allocation3], 4
      %s20 = int_to_ptr.vmem [resolvable:$true] %s19
      %25 = dma.hbm_to_vmem [thread:$0]  %s18, 1024, %s20, [#allocation4], 128, 128, 8
    $region5: #{tpu_custom_call.1} parent=1 // pred_fallthru
      _
    // Predicated region
    $region6: #{tpu_custom_call.1} parent=1 // pred_check
      _
    $region7: #{tpu_custom_call.1} parent=1 // pred_check_branch
      %27 = sbr.rel (0) target = $region9
    $region8: #{tpu_custom_call.1} parent=1 // pred_region
      %s28 = sadd.s32 0, 0
      %s29 = smul.u32 8, %s28
      %s31 = ssub.s32 1024, 1024
      %32 = vsyncadd [#allocation7], %s31
      %s33 = smul.addr %s29, 128
      %s34 = scalar_lea.hbm %s1, %s33
      %s35 = sshll.u32 [#allocation6], 4
      %s36 = int_to_ptr.vmem [resolvable:$true] %s35
      %41 = dma.hbm_to_vmem [thread:$0]  %s34, 1024, %s36, [#allocation7], 128, 128, 8
    $region9: #{tpu_custom_call.1} parent=1 // pred_fallthru
      _
    // Predicated region
    $region10: #{tpu_custom_call.1} parent=1 // pred_check
      _
    $region11: #{tpu_custom_call.1} parent=1 // pred_check_branch
      %43 = sbr.rel (0) target = $region13
    $region12: #{tpu_custom_call.1} parent=1 // pred_region
      %44 = dma.done [#allocation4], 1024
    $region13: #{tpu_custom_call.1} parent=1 // pred_fallthru
      _
    // Predicated region
    $region14: #{tpu_custom_call.1} parent=1 // pred_check
      _
    $region15: #{tpu_custom_call.1} parent=1 // pred_check_branch
      %46 = sbr.rel (0) target = $region17
    $region16: #{tpu_custom_call.1} parent=1 // pred_region
      %47 = dma.done [#allocation7], 1024
    $region17: #{tpu_custom_call.1} parent=1 // pred_fallthru
      _
    %s48 = sadd.s32 0, 0
    %s49 = smul.u32 8, %s48
    %s50 = sadd.s32 0, 0
    %s51 = smul.u32 8, %s50
    %p52 = scmp.eq.s32.totalorder 0, 0
    // Predicated region
    $region18: #{tpu_custom_call.1} parent=1 // pred_check
      %p53 = pneg %p52
    $region19: #{tpu_custom_call.1} parent=1 // pred_check_branch
      %55 = sbr.rel (%p53) target = $region21
    $region20: #{tpu_custom_call.1} parent=1 // pred_region
      %56 = vst [vmem:[#allocation2] sm:$0xff] 0.0
    $region21: #{tpu_custom_call.1} parent=1 // pred_fallthru
      _
    %v57 = vld [vmem:[#allocation3] sm:$0xff]
    %v58 = vld [vmem:[#allocation3 + $0x8] sm:$0xff]
    %v59 = vld [vmem:[#allocation3 + $0x10] sm:$0xff]
    %v60 = vld [vmem:[#allocation3 + $0x18] sm:$0xff]
    %v61 = vld [vmem:[#allocation3 + $0x20] sm:$0xff]
    %v62 = vld [vmem:[#allocation3 + $0x28] sm:$0xff]
    %v63 = vld [vmem:[#allocation3 + $0x30] sm:$0xff]
    %v64 = vld [vmem:[#allocation3 + $0x38] sm:$0xff]
    %v65 = vld [vmem:[#allocation6] sm:$0xff]
    %v66 = vld [vmem:[#allocation6 + $0x8] sm:$0xff]
    %v67 = vld [vmem:[#allocation6 + $0x10] sm:$0xff]
    %v68 = vld [vmem:[#allocation6 + $0x18] sm:$0xff]
    %v69 = vld [vmem:[#allocation6 + $0x20] sm:$0xff]
    %v70 = vld [vmem:[#allocation6 + $0x28] sm:$0xff]
    %v71 = vld [vmem:[#allocation6 + $0x30] sm:$0xff]
    %v72 = vld [vmem:[#allocation6 + $0x38] sm:$0xff]
    %v73 = vsub.f32 1.0, %v57
    %v74 = vsub.f32 1.0, %v58
    %v75 = vsub.f32 1.0, %v59
    %v76 = vsub.f32 1.0, %v60
    %v77 = vsub.f32 1.0, %v61
    %v78 = vsub.f32 1.0, %v62
    %v79 = vsub.f32 1.0, %v63
    %v80 = vsub.f32 1.0, %v64
    %v81 = vmax.f32 %v73, 0.0
    %v82 = vmax.f32 %v74, 0.0
    %v83 = vmax.f32 %v75, 0.0
    %v84 = vmax.f32 %v76, 0.0
    %v85 = vmax.f32 %v77, 0.0
    %v86 = vmax.f32 %v78, 0.0
    %v87 = vmax.f32 %v79, 0.0
    %v88 = vmax.f32 %v80, 0.0
    %v89 = vadd.f32 %v65, 1.0
    %v90 = vadd.f32 %v66, 1.0
    %v91 = vadd.f32 %v67, 1.0
    %v92 = vadd.f32 %v68, 1.0
    %v93 = vadd.f32 %v69, 1.0
    %v94 = vadd.f32 %v70, 1.0
    %v95 = vadd.f32 %v71, 1.0
    %v96 = vadd.f32 %v72, 1.0
    %v97 = vmax.f32 %v89, 0.0
    %v98 = vmax.f32 %v90, 0.0
    %v99 = vmax.f32 %v91, 0.0
    %v100 = vmax.f32 %v92, 0.0
    %v101 = vmax.f32 %v93, 0.0
    %v102 = vmax.f32 %v94, 0.0
    %v103 = vmax.f32 %v95, 0.0
    %v104 = vmax.f32 %v96, 0.0
    %v105 = vadd.f32 %v81, %v97
    %v106 = vadd.f32 %v82, %v98
    %v107 = vadd.f32 %v83, %v99
    %v108 = vadd.f32 %v84, %v100
    %v109 = vadd.f32 %v85, %v101
    %v110 = vadd.f32 %v86, %v102
    %v111 = vadd.f32 %v87, %v103
    %v112 = vadd.f32 %v88, %v104
    %v113 = vld [vmem:[#allocation2] sm:$0xff]
    %v114 = vadd.f32 %v105, %v106
    %v115 = vadd.f32 %v114, %v107
    %v116 = vadd.f32 %v115, %v108
    %v117 = vadd.f32 %v116, %v109
    %v118 = vadd.f32 %v117, %v110
    %v119 = vadd.f32 %v118, %v111
    %v120 = vadd.f32 %v119, %v112
    %v121 = vadd.f32 %v113, %v120
    %122 = vst [vmem:[#allocation2] sm:$0xff] %v121
    // Predicated region
    $region22: #{tpu_custom_call.1} parent=1 // pred_check
      %p123 = pneg %p52
    $region23: #{tpu_custom_call.1} parent=1 // pred_check_branch
      %125 = sbr.rel (%p123) target = $region25
    $region24: #{tpu_custom_call.1} parent=1 // pred_region
      %v126 = vld [vmem:[#allocation2] sm:$0xff]
      %127 = vadd.xlane.f32.xlu0 %v126
      %v128 = vpop.xlane.xlu0 %127
      %v129 = vrot.slane %v128, 4
      %v130 = vadd.f32 %v128, %v129
      %v131 = vrot.slane %v130, 2
      %v132 = vadd.f32 %v130, %v131
      %v133 = vrot.slane %v132, 1
      %v134 = vadd.f32 %v132, %v133
      %s135 = vtos %v134
      %v136 = vstv %s135
      %vm137 = vcmask 0
      %138 = vst.msk [vmem:[#allocation8] sm:$0x1] %vm137, %v136
    $region25: #{tpu_custom_call.1} parent=1 // pred_fallthru
      _
    // Predicated region
    $region26: #{tpu_custom_call.1} parent=1 // pred_check
      _
    $region27: #{tpu_custom_call.1} parent=1 // pred_check_branch
      %140 = sbr.rel (0) target = $region29
    $region28: #{tpu_custom_call.1} parent=1 // pred_region
      %s142 = ssub.s32 16, 16
      %143 = vsyncadd [#allocation5], %s142
      %s145 = sshll.u32 [#allocation8], 4
      %s146 = int_to_ptr.vmem [resolvable:$true] %s145
      %148 = dma.vmem_to_hbm [thread:$0]  %s146, 16, %s2, [#allocation5]
    $region29: #{tpu_custom_call.1} parent=1 // pred_fallthru
      _
    // Predicated region
    $region30: #{tpu_custom_call.1} parent=1 // pred_check
      _
    $region31: #{tpu_custom_call.1} parent=1 // pred_check_branch
      %150 = sbr.rel (0) target = $region33
    $region32: #{tpu_custom_call.1} parent=1 // pred_region
      %151 = dma.done [#allocation5], 16
    $region33: #{tpu_custom_call.1} parent=1 // pred_fallthru
      _
    %152 = vsyncpa [#allocation4], 1
    %153 = vsyncpa [#allocation7], 1
    %154 = vsyncpa [#allocation5], 1

</llo_original>
